<compile_context>
chip_gen: v7x
topology: tpu7x:2x2x1
jax: 0.10.0
libtpu: 0.0.40
codegen_flags: <defaults>
</compile_context>

<pallas_src>
import jax
import jax.numpy as jnp
from jax.experimental import pallas as pl
from jax.experimental.pallas import tpu as pltpu

# Deterministic init for Rational('relu'), version "A", degrees (5, 4)
# (Pade [5/4] approximation of (leaky)ReLU, as used by the rational_activations
# library / PAU paper).  Synthetic deterministic parameters, not a checkpoint.
NUMERATOR_INIT = (0.02996348, 0.61690165, 2.37539147,
                  3.06608078, 1.52474449, 0.25281987)
DENOMINATOR_INIT = (1.19160814, 4.40811795, 0.91111034, 0.34885983)

_LANES = 128


def _round_up(v, m):
    return ((v + m - 1) // m) * m


def _rational_f32(xf, a, b):
    """P(x), Q(x) in f32 via Horner (shared by kernel and jnp tail path)."""
    p = a[5] * xf + a[4]
    p = p * xf + a[3]
    p = p * xf + a[2]
    p = p * xf + a[1]
    p = p * xf + a[0]

    q = b[3] * xf + b[2]
    q = q * xf + b[1]
    q = q * xf + b[0]
    q = jnp.abs(q * xf) + 1.0
    return p, q


def _rational_jnp(x, num_coeffs, den_coeffs):
    """Plain-jnp fallback for tiny inputs / <128-element tails."""
    a = tuple(float(c) for c in num_coeffs)
    b = tuple(float(c) for c in den_coeffs)
    xf = x.astype(jnp.float32)
    p, q = _rational_f32(xf, a, b)
    return (p / q).astype(x.dtype)


def _make_rational_kernel(num_coeffs, den_coeffs, refine_recip):
    """Elementwise rational-activation kernel with baked-in coefficients."""
    a = tuple(float(c) for c in num_coeffs)   # a0..a5
    b = tuple(float(c) for c in den_coeffs)   # b0..b3

    def kernel(x_ref, o_ref):
        x = x_ref[...].astype(jnp.float32)
        p, q = _rational_f32(x, a, b)

        # Divide on the EUP: approximate reciprocal; Newton-Raphson refinement
        # only when the output needs full f32 precision (Q >= 1, so the
        # ~12-bit approx result is already plenty for bf16/f16 outputs).
        r = pl.reciprocal(q, approx=True)
        if refine_recip:
            r = r * (2.0 - q * r)

        o_ref[...] = (p * r).astype(o_ref.dtype)

    return kernel


def rational_on_cluster_forward(x, num_coeffs=NUMERATOR_INIT,
                                den_coeffs=DENOMINATOR_INIT):
    """Applies the Rational('relu') activation elementwise (Pallas TPU kernel).

    x: any shape (e.g. NCHW), float dtype.  Returns same shape/dtype.
    """
    orig_shape = x.shape
    dtype = x.dtype

    flat = x.reshape(-1)
    n = flat.shape[0]

    rows = n // _LANES
    rem = n - rows * _LANES

    # Tiny input (< one 128-lane row): no kernel launch, plain jnp.
    if rows == 0:
        return _rational_jnp(flat, num_coeffs, den_coeffs).reshape(orig_shape)

    # 128-aligned prefix (zero-copy reshape; no full-array pad + slice).
    main = flat[: rows * _LANES].reshape(rows, _LANES)

    itemsize = jnp.dtype(dtype).itemsize
    sub = max(8, 32 // max(1, itemsize))            # per-dtype sublane packing
    lane_bytes = _LANES * itemsize

    # ~4 MiB target block (in+out double-buffered ~16 MiB VMEM, safe on v7x's
    # 64 MiB), floor ~256 KiB so mid-sized tensors still split into several
    # grid steps for 2-TC balance.
    tr_target = _round_up(max(sub, (4 << 20) // lane_bytes), sub)
    tr_floor = _round_up(max(sub, (256 << 10) // lane_bytes), sub)

    tr = _round_up(pl.cdiv(rows, 8), sub)           # aim for ~8 grid steps
    tr = max(tr_floor, min(tr, tr_target))
    tr = min(tr, _round_up(rows, sub))              # never bigger than the array
    n_steps = pl.cdiv(rows, tr)

    # Prefer an even number of grid steps so the "parallel" axis splits evenly
    # across the two v7x TensorCores (no effect on single-TC v5e/v6e).
    if n_steps > 1 and n_steps % 2:
        tr_even = max(sub, _round_up(pl.cdiv(rows, n_steps + 1), sub))
        if pl.cdiv(rows, tr_even) % 2 == 0:
            tr = tr_even
            n_steps = pl.cdiv(rows, tr)

    grid = (n_steps,)

    # Newton refinement only for full-precision (>=32-bit float) outputs.
    refine_recip = itemsize >= 4
    kernel = _make_rational_kernel(num_coeffs, den_coeffs, refine_recip)

    n_main = rows * _LANES
    cost = pl.CostEstimate(
        flops=22 * n_main,                 # ~2 Horner chains + abs + Newton + mul
        transcendentals=n_main,            # one reciprocal per element
        bytes_accessed=2 * n_main * itemsize,
    )

    out_main = pl.pallas_call(
        kernel,
        out_shape=jax.ShapeDtypeStruct((rows, _LANES), dtype),
        grid_spec=pltpu.PrefetchScalarGridSpec(
            num_scalar_prefetch=0,
            grid=grid,
            in_specs=[pl.BlockSpec((tr, _LANES), lambda i: (i, 0))],
            out_specs=pl.BlockSpec((tr, _LANES), lambda i: (i, 0)),
        ),
        compiler_params=pltpu.CompilerParams(
            dimension_semantics=("parallel",),
            # ~16 MiB in flight (2 arrays x 2 buffers x <=4 MiB); 32 MiB raises
            # the scoped default and stays well within v7x's 64 MiB VMEM.
            vmem_limit_bytes=32 * 1024 * 1024,
            # Let XLA fold elementwise producers (e.g. the reshape / preceding
            # op) into the Pallas input read — saves an HBM pass when fused.
            allow_input_fusion=[True],
        ),
        cost_estimate=cost,
    )(main)

    if rem == 0:
        return out_main.reshape(orig_shape)

    # <128-element tail: plain jnp (negligible cost) instead of a full-array
    # pad + slice that would double HBM traffic.
    tail_out = _rational_jnp(flat[rows * _LANES:], num_coeffs, den_coeffs)
    return jnp.concatenate([out_main.reshape(-1), tail_out]).reshape(orig_shape)


def _reference(x, a=NUMERATOR_INIT, b=DENOMINATOR_INIT):
    xf = x.astype(jnp.float32)
    p = a[0] + a[1]*xf + a[2]*xf**2 + a[3]*xf**3 + a[4]*xf**4 + a[5]*xf**5
    q = 1.0 + jnp.abs(b[0]*xf + b[1]*xf**2 + b[2]*xf**3 + b[3]*xf**4)
    return (p / q).astype(x.dtype)


if __name__ == "__main__":
    key = jax.random.PRNGKey(0)
    # Small NCHW input consistent with a conv-style activation use (aligned path).
    x = jax.random.normal(key, (2, 4, 16, 16), dtype=jnp.float32)

    y = jax.block_until_ready(rational_on_cluster_forward(x))
    y_ref = _reference(x)
    assert y.shape == x.shape and y.dtype == x.dtype
    assert jnp.allclose(y, y_ref, atol=1e-5, rtol=1e-5)

    # Non-128-aligned size: kernel on aligned prefix + jnp tail (no pad/slice).
    x2 = jax.random.normal(jax.random.PRNGKey(1), (2, 3, 67), dtype=jnp.float32)
    y2 = jax.block_until_ready(rational_on_cluster_forward(x2))
    assert y2.shape == x2.shape and y2.dtype == x2.dtype
    assert jnp.allclose(y2, _reference(x2), atol=1e-5, rtol=1e-5)

    # bf16 I/O path (Newton step dropped inside the kernel).
    x3 = jax.random.normal(jax.random.PRNGKey(2), (2, 4, 16, 16), dtype=jnp.bfloat16)
    y3 = jax.block_until_ready(rational_on_cluster_forward(x3))
    assert y3.shape == x3.shape and y3.dtype == x3.dtype
    assert jnp.allclose(y3.astype(jnp.float32), _reference(x3).astype(jnp.float32),
                        atol=2e-2, rtol=2e-2)

    # TODO(synk): with_clusters=True path (ClusterActivation / k-means style
    # tensor clustering with per-cluster rationals) is stateful / data-dependent
    # clustering and is not implemented here; default forward uses a single
    # rational activation, which is what the kernel computes.

    print("KERNEL_OK")
</pallas_src>

<mosaic_0001>
module attributes {stable_mosaic.version = 11 : i64} {
  func.func @kernel(%arg0: i32, %arg1: memref<16x128xf32, #tpu.memory_space<vmem>>, %arg2: memref<16x128xf32, #tpu.memory_space<vmem>>) attributes {dimension_semantics = [#tpu.dimension_semantics<parallel>], iteration_bounds = array<i64: 1>, scalar_prefetch = 0 : i64, scratch_operands = 0 : i64, tpu.core_type = #tpu.core_type<tc>, window_params = [{transform_indices = @transform_0, window_bounds = array<i64: 16, 128>}, {transform_indices = @transform_1, window_bounds = array<i64: 16, 128>}]} {
    %c0 = arith.constant 0 : index
    %c0_0 = arith.constant 0 : index
    %0 = vector.load %arg1[%c0, %c0_0] : memref<16x128xf32, #tpu.memory_space<vmem>>, vector<16x128xf32>
    %cst = arith.constant 0.252819866 : f32
    %1 = vector.broadcast %cst : f32 to vector<16x128xf32>
    %2 = arith.mulf %1, %0 : vector<16x128xf32>
    %cst_1 = arith.constant 1.52474451 : f32
    %3 = vector.broadcast %cst_1 : f32 to vector<16x128xf32>
    %4 = arith.addf %2, %3 : vector<16x128xf32>
    %5 = arith.mulf %4, %0 : vector<16x128xf32>
    %cst_2 = arith.constant 3.06608081 : f32
    %6 = vector.broadcast %cst_2 : f32 to vector<16x128xf32>
    %7 = arith.addf %5, %6 : vector<16x128xf32>
    %8 = arith.mulf %7, %0 : vector<16x128xf32>
    %cst_3 = arith.constant 2.37539148 : f32
    %9 = vector.broadcast %cst_3 : f32 to vector<16x128xf32>
    %10 = arith.addf %8, %9 : vector<16x128xf32>
    %11 = arith.mulf %10, %0 : vector<16x128xf32>
    %cst_4 = arith.constant 0.616901636 : f32
    %12 = vector.broadcast %cst_4 : f32 to vector<16x128xf32>
    %13 = arith.addf %11, %12 : vector<16x128xf32>
    %14 = arith.mulf %13, %0 : vector<16x128xf32>
    %cst_5 = arith.constant 0.0299634803 : f32
    %15 = vector.broadcast %cst_5 : f32 to vector<16x128xf32>
    %16 = arith.addf %14, %15 : vector<16x128xf32>
    %cst_6 = arith.constant 0.348859817 : f32
    %17 = vector.broadcast %cst_6 : f32 to vector<16x128xf32>
    %18 = arith.mulf %17, %0 : vector<16x128xf32>
    %cst_7 = arith.constant 0.911110341 : f32
    %19 = vector.broadcast %cst_7 : f32 to vector<16x128xf32>
    %20 = arith.addf %18, %19 : vector<16x128xf32>
    %21 = arith.mulf %20, %0 : vector<16x128xf32>
    %cst_8 = arith.constant 4.40811777 : f32
    %22 = vector.broadcast %cst_8 : f32 to vector<16x128xf32>
    %23 = arith.addf %21, %22 : vector<16x128xf32>
    %24 = arith.mulf %23, %0 : vector<16x128xf32>
    %cst_9 = arith.constant 1.19160819 : f32
    %25 = vector.broadcast %cst_9 : f32 to vector<16x128xf32>
    %26 = arith.addf %24, %25 : vector<16x128xf32>
    %27 = arith.mulf %26, %0 : vector<16x128xf32>
    %28 = math.absf %27 : vector<16x128xf32>
    %cst_10 = arith.constant 1.000000e+00 : f32
    %29 = vector.broadcast %cst_10 : f32 to vector<16x128xf32>
    %30 = arith.addf %28, %29 : vector<16x128xf32>
    %31 = tpu.reciprocal %30 {approx = true} : vector<16x128xf32> -> vector<16x128xf32>
    %32 = arith.mulf %30, %31 : vector<16x128xf32>
    %cst_11 = arith.constant 2.000000e+00 : f32
    %33 = vector.broadcast %cst_11 : f32 to vector<16x128xf32>
    %34 = arith.subf %33, %32 : vector<16x128xf32>
    %35 = arith.mulf %31, %34 : vector<16x128xf32>
    %36 = arith.mulf %16, %35 : vector<16x128xf32>
    %c0_12 = arith.constant 0 : index
    %c0_13 = arith.constant 0 : index
    %37 = vector.load %arg2[%c0_12, %c0_13] : memref<16x128xf32, #tpu.memory_space<vmem>>, vector<16x128xf32>
    tpu.vector_store %arg2[%c0_12, %c0_13], %36 {strides = array<i32>} : memref<16x128xf32, #tpu.memory_space<vmem>>, vector<16x128xf32>,
    return
  }
  func.func @transform_0(%arg0: i32) -> (i32, i32) {
    %c0_i32 = arith.constant 0 : i32
    %c0_i32_0 = arith.constant 0 : i32
    return %arg0, %c0_i32 : i32, i32
  }
  func.func @transform_1(%arg0: i32) -> (i32, i32) {
    %c0_i32 = arith.constant 0 : i32
    %c0_i32_0 = arith.constant 0 : i32
    return %arg0, %c0_i32 : i32, i32
  }
}

</mosaic_0001>

<llo_original>
// kernel: tpu_custom_call.1
$region0: #{tpu_custom_call.1}
  #allocation0 [shape = 'u32[]', space=smem, size = 0x4, offset = 0x4, fixed_abs, tag = 'smem constant byte address 0x4 - core index']
  #allocation1 [shape = 'u32[144,128]{1,0:T(1,128)}', space=vmem, size = 0x12000, scoped, tag = 'internal scratch']
  %s0 = inlined_call_operand.hbm [shape: f32[16,128], index: 0, kind: input, shape index: {}]
  %s1 = inlined_call_operand.hbm [shape: f32[16,128], index: 1, kind: output, shape index: {}]
  %s2 = sld [smem:[#allocation0]]
  $region18: #{tpu_custom_call.1} parent=0
    _
  %s4 = ssub.s32 1, %s2
  %s5 = scalar_select 0, %s4, %s2
  $region1: #{tpu_custom_call.1} parent=0
    #allocation2 [shape = 'u8[8192]{0}', space=vmem, size = 0x2000, scoped, tag = 'input window, operand 0, single buffered']
    #allocation3 [shape = 's32[1]{0}', space=sflag, size = 0x4, scoped, tag = 'scoped memory for tpu_custom_call.1']
    #allocation4 [shape = 's32[1]{0}', space=sflag, size = 0x4, scoped, tag = 'scoped memory for tpu_custom_call.1']
    #allocation5 [shape = 'u8[8192]{0}', space=vmem, size = 0x2000, scoped, tag = 'output window, operand 0, single buffered']
    %6 = vsyncpa [#allocation3], 0
    %7 = vsyncpa [#allocation4], 0
    // Predicated region
    $region2: #{tpu_custom_call.1} parent=1 // pred_check
      _
    $region3: #{tpu_custom_call.1} parent=1 // pred_check_branch
      %9 = sbr.rel (0) target = $region5
    $region4: #{tpu_custom_call.1} parent=1 // pred_region
      %s11 = ssub.s32 256, 256
      %12 = vsyncadd [#allocation3], %s11
      %s13 = sshll.u32 [#allocation2], 4
      %s14 = int_to_ptr.vmem [resolvable:$true] %s13
      %19 = dma.hbm_to_vmem [thread:$0]  %s0, 256, %s14, [#allocation3], 128, 128, 8
    $region5: #{tpu_custom_call.1} parent=1 // pred_fallthru
      _
    // Predicated region
    $region6: #{tpu_custom_call.1} parent=1 // pred_check
      _
    $region7: #{tpu_custom_call.1} parent=1 // pred_check_branch
      %21 = sbr.rel (0) target = $region9
    $region8: #{tpu_custom_call.1} parent=1 // pred_region
      %22 = dma.done [#allocation3], 256
    $region9: #{tpu_custom_call.1} parent=1 // pred_fallthru
      _
    %v23 = vld [vmem:[#allocation2] sm:$0xff]
    %v24 = vld [vmem:[#allocation2 + $0x8] sm:$0xff]
    %v25 = vmul.f32 %v23, 0.25281987
    %v26 = vmul.f32 %v24, 0.25281987
    %v27 = vadd.f32 %v25, 1.5247445
    %v28 = vadd.f32 %v26, 1.5247445
    %v29 = vmul.f32 %v27, %v23
    %v30 = vmul.f32 %v28, %v24
    %v31 = vadd.f32 %v29, 3.0660808
    %v32 = vadd.f32 %v30, 3.0660808
    %v33 = vmul.f32 %v31, %v23
    %v34 = vmul.f32 %v32, %v24
    %v35 = vadd.f32 %v33, 2.3753915
    %v36 = vadd.f32 %v34, 2.3753915
    %v37 = vmul.f32 %v35, %v23
    %v38 = vmul.f32 %v36, %v24
    %v39 = vadd.f32 %v37, 0.61690164
    %v40 = vadd.f32 %v38, 0.61690164
    %v41 = vmul.f32 %v39, %v23
    %v42 = vmul.f32 %v40, %v24
    %v43 = vadd.f32 %v41, 0.02996348
    %v44 = vadd.f32 %v42, 0.02996348
    %v45 = vmul.f32 %v23, 0.34885982
    %v46 = vmul.f32 %v24, 0.34885982
    %v47 = vadd.f32 %v45, 0.91111034
    %v48 = vadd.f32 %v46, 0.91111034
    %v49 = vmul.f32 %v47, %v23
    %v50 = vmul.f32 %v48, %v24
    %v51 = vadd.f32 %v49, 4.408118
    %v52 = vadd.f32 %v50, 4.408118
    %v53 = vmul.f32 %v51, %v23
    %v54 = vmul.f32 %v52, %v24
    %v55 = vadd.f32 %v53, 1.1916082
    %v56 = vadd.f32 %v54, 1.1916082
    %v57 = vmul.f32 %v55, %v23
    %v58 = vmul.f32 %v56, %v24
    %v59 = vand.u32 2147483647, %v57
    %v60 = vand.u32 2147483647, %v58
    %v61 = vadd.f32 %v59, 1.0
    %v62 = vadd.f32 %v60, 1.0
    %v63 = vrcp.pop %v61
    %v64 = vrcp.pop %v62
    %v65 = vmul.f32 %v61, %v63
    %v66 = vmul.f32 %v62, %v64
    %v67 = vsub.f32 2.0, %v65
    %v68 = vsub.f32 2.0, %v66
    %v69 = vmul.f32 %v63, %v67
    %v70 = vmul.f32 %v64, %v68
    %v71 = vmul.f32 %v43, %v69
    %v72 = vmul.f32 %v44, %v70
    %73 = vst [vmem:[#allocation5] sm:$0xff] %v71
    %74 = vst [vmem:[#allocation5 + $0x8] sm:$0xff] %v72
    // Predicated region
    $region10: #{tpu_custom_call.1} parent=1 // pred_check
      _
    $region11: #{tpu_custom_call.1} parent=1 // pred_check_branch
      %76 = sbr.rel (0) target = $region13
    $region12: #{tpu_custom_call.1} parent=1 // pred_region
      %s78 = ssub.s32 256, 256
      %79 = vsyncadd [#allocation4], %s78
      %s80 = sshll.u32 [#allocation5], 4
      %s81 = int_to_ptr.vmem [resolvable:$true] %s80
      %86 = dma.vmem_to_hbm [thread:$0]  %s81, 256, %s1, [#allocation4], 128, 128, 8
    $region13: #{tpu_custom_call.1} parent=1 // pred_fallthru
      _
    // Predicated region
    $region14: #{tpu_custom_call.1} parent=1 // pred_check
      _
    $region15: #{tpu_custom_call.1} parent=1 // pred_check_branch
      %88 = sbr.rel (0) target = $region17
    $region16: #{tpu_custom_call.1} parent=1 // pred_region
      %89 = dma.done [#allocation4], 256
    $region17: #{tpu_custom_call.1} parent=1 // pred_fallthru
      _
    %90 = vsyncpa [#allocation3], 1
    %91 = vsyncpa [#allocation4], 1

</llo_original>
